<compile_context>
chip_gen: v7x
topology: tpu7x:2x2x1
jax: 0.10.0
libtpu: 0.0.40
codegen_flags: <defaults>
</compile_context>

<pallas_src>
import functools

import jax
import jax.numpy as jnp
from jax import lax
from jax.experimental import pallas as pl
from jax.experimental.pallas import tpu as pltpu


def _round_up(x: int, m: int) -> int:
    return ((x + m - 1) // m) * m


def _seq_kernel(x_ref, w_ref, b_ref, o_ref, acc_ref):
    """One (TILE_M, TILE_N) output tile, accumulated over the K grid axis.

    x_ref: (TILE_M, TILE_K)   activations
    w_ref: (TILE_N, TILE_K)   weight in torch [out, in] layout (no transpose needed)
    b_ref: (1, TILE_N)        bias
    o_ref: (TILE_M, TILE_N)   output tile
    acc_ref: VMEM fp32 accumulator, persistent across the K axis
    """
    k = pl.program_id(2)

    @pl.when(k == 0)
    def _():
        acc_ref[...] = jnp.zeros_like(acc_ref)

    # x @ W.T on the MXU with fp32 accumulation; contract dim 1 of both operands.
    acc_ref[...] += lax.dot_general(
        x_ref[...],
        w_ref[...],
        dimension_numbers=(((1,), (1,)), ((), ())),
        preferred_element_type=jnp.float32,
    )

    @pl.when(k == pl.num_programs(2) - 1)
    def _():
        y = acc_ref[...] + b_ref[...]            # bias broadcast over rows (VPU)
        y = jnp.where(y >= 0, y, 0.01 * y)       # LeakyReLU(0.01)          (VPU)
        # Sigmoid: exp (EUP) + approximate reciprocal (EUP) -> VPU stays free.
        y = pl.reciprocal(1.0 + jnp.exp(-y), approx=True)
        o_ref[...] = y.astype(o_ref.dtype)


@functools.partial(jax.jit, static_argnames=("tile_m", "tile_n", "tile_k"))
def sequential_forward(x, weight, bias, *, tile_m=128, tile_n=128, tile_k=512):
    """x: [B, in], weight: [out, in] (torch layout), bias: [out] -> [B, out]."""
    M, K = x.shape
    N, K_w = weight.shape
    assert K == K_w, "weight in-features must match x features"

    # Tile sizes: sublane-aligned M, lane-dense (multiple-of-128) N and K.
    tm = min(_round_up(M, 8), tile_m)
    tk = min(_round_up(K, 128), tile_k)
    tn = min(_round_up(N, 128), tile_n)

    M_pad = _round_up(M, tm)
    K_pad = _round_up(K, tk)
    N_pad = _round_up(N, tn)

    # Zero-padding is exact for the matmul; padded rows/cols are sliced off below.
    xp = x if (M_pad == M and K_pad == K) else jnp.pad(
        x, ((0, M_pad - M), (0, K_pad - K)))
    wp = weight if (N_pad == N and K_pad == K) else jnp.pad(
        weight, ((0, N_pad - N), (0, K_pad - K)))
    bp = bias.reshape(1, N)
    if N_pad != N:
        bp = jnp.pad(bp, ((0, 0), (0, N_pad - N)))

    grid = (M_pad // tm, N_pad // tn, K_pad // tk)

    # VMEM budget: double-buffered inputs + double-buffered output + accumulator.
    itemsize = 4
    vmem_bytes = itemsize * (2 * tm * tk + 2 * tn * tk + 2 * tn
                             + 2 * tm * tn + tm * tn)
    vmem_limit = int(min(max(2 * vmem_bytes, 8 << 20), 48 << 20))  # < 64 MiB (v7x)

    cost = pl.CostEstimate(
        flops=2 * M_pad * N_pad * K_pad,
        transcendentals=M_pad * N_pad,                       # one exp per output
        bytes_accessed=itemsize * (M_pad * K_pad + N_pad * K_pad
                                   + M_pad * N_pad + N_pad),
    )

    out = pl.pallas_call(
        _seq_kernel,
        out_shape=jax.ShapeDtypeStruct((M_pad, N_pad), x.dtype),
        grid_spec=pl.GridSpec(
            grid=grid,
            in_specs=[
                pl.BlockSpec((tm, tk), lambda i, j, k: (i, k)),   # x tile
                pl.BlockSpec((tn, tk), lambda i, j, k: (j, k)),   # weight tile
                pl.BlockSpec((1, tn), lambda i, j, k: (0, j)),    # bias tile
            ],
            out_specs=pl.BlockSpec((tm, tn), lambda i, j, k: (i, j)),
            scratch_shapes=[pltpu.VMEM((tm, tn), jnp.float32)],
        ),
        compiler_params=pltpu.CompilerParams(
            dimension_semantics=("parallel", "parallel", "arbitrary"),
            vmem_limit_bytes=vmem_limit,
        ),
        cost_estimate=cost,
    )(xp, wp, bp)

    return out[:M, :N]


def reference_forward(x, weight, bias):
    y = x @ weight.T + bias
    y = jnp.where(y >= 0, y, 0.01 * y)
    return 1.0 / (1.0 + jnp.exp(-y))


def _check(key, batch, input_size, output_size, atol=3e-3, rtol=3e-3):
    kx, kw, kb = jax.random.split(key, 3)
    x = jax.random.normal(kx, (batch, input_size), dtype=jnp.float32)
    bound = 1.0 / (input_size ** 0.5)
    weight = jax.random.uniform(kw, (output_size, input_size),
                                minval=-bound, maxval=bound, dtype=jnp.float32)
    bias = jax.random.uniform(kb, (output_size,),
                              minval=-bound, maxval=bound, dtype=jnp.float32)

    out = jax.block_until_ready(sequential_forward(x, weight, bias))
    ref = reference_forward(x, weight, bias)

    assert out.shape == (batch, output_size)
    assert jnp.allclose(out, ref, atol=atol, rtol=rtol), (
        f"mismatch vs reference for shape {(batch, input_size, output_size)}: "
        f"max abs err {float(jnp.max(jnp.abs(out - ref)))}")


if __name__ == "__main__":
    key = jax.random.PRNGKey(0)
    k1, k2 = jax.random.split(key)

    # Tiny shape matching the original module's toy usage (exercises padding path).
    _check(k1, batch=16, input_size=32, output_size=16)

    # Multi-tile shape: grid (2, 2, 2) -> exercises K-axis accumulation and
    # parallel M/N tiling (megacore-shardable on v7x).
    _check(k2, batch=256, input_size=1024, output_size=256)

    # Dropout in the original forward has no effect on the output (its result is
    # discarded, and it is identity at inference), so it is not implemented.
    print("KERNEL_OK")
</pallas_src>

<mosaic_0001>
module attributes {stable_mosaic.version = 11 : i64} {
  func.func @_seq_kernel(%arg0: i32, %arg1: i32, %arg2: i32, %arg3: memref<16x128xf32, #tpu.memory_space<vmem>>, %arg4: memref<128x128xf32, #tpu.memory_space<vmem>>, %arg5: memref<1x128xf32, #tpu.memory_space<vmem>>, %arg6: memref<16x128xf32, #tpu.memory_space<vmem>>, %arg7: memref<16x128xf32, #tpu.memory_space<vmem>>) attributes {dimension_semantics = [#tpu.dimension_semantics<parallel>, #tpu.dimension_semantics<parallel>, #tpu.dimension_semantics<arbitrary>], iteration_bounds = array<i64: 1, 1, 1>, scalar_prefetch = 0 : i64, scratch_operands = 1 : i64, tpu.core_type = #tpu.core_type<tc>, window_params = [{transform_indices = @transform_0, window_bounds = array<i64: 16, 128>}, {transform_indices = @transform_1, window_bounds = array<i64: 128, 128>}, {transform_indices = @transform_2, window_bounds = array<i64: 1, 128>}, {transform_indices = @transform_3, window_bounds = array<i64: 16, 128>}]} {
    %c0_i32 = arith.constant 0 : i32
    %0 = arith.cmpi eq, %arg2, %c0_i32 : i32
    %1 = arith.extui %0 : i1 to i32
    %c0_i32_0 = arith.constant 0 : i32
    %2 = arith.cmpi ne, %1, %c0_i32_0 : i32
    scf.if %2 {
      %cst_10 = arith.constant 0.000000e+00 : f32
      %12 = vector.broadcast %cst_10 : f32 to vector<16x128xf32>
      %c0_11 = arith.constant 0 : index
      %c0_12 = arith.constant 0 : index
      %13 = vector.load %arg7[%c0_11, %c0_12] : memref<16x128xf32, #tpu.memory_space<vmem>>, vector<16x128xf32>
      tpu.vector_store %arg7[%c0_11, %c0_12], %12 {strides = array<i32>} : memref<16x128xf32, #tpu.memory_space<vmem>>, vector<16x128xf32>,
    } else {
    }
    %c0 = arith.constant 0 : index
    %c0_1 = arith.constant 0 : index
    %3 = vector.load %arg7[%c0, %c0_1] : memref<16x128xf32, #tpu.memory_space<vmem>>, vector<16x128xf32>
    %c0_2 = arith.constant 0 : index
    %c0_3 = arith.constant 0 : index
    %4 = vector.load %arg3[%c0_2, %c0_3] : memref<16x128xf32, #tpu.memory_space<vmem>>, vector<16x128xf32>
    %c0_4 = arith.constant 0 : index
    %c0_5 = arith.constant 0 : index
    %5 = vector.load %arg4[%c0_4, %c0_5] : memref<128x128xf32, #tpu.memory_space<vmem>>, vector<128x128xf32>
    %cst = arith.constant dense<0.000000e+00> : vector<16x128xf32>
    %6 = tpu.matmul %4, %5, %cst {dimension_numbers = #tpu.dot_dimension_numbers<[1], [1], [0], [0], [0, 0, 1, 0], [], []>} : vector<16x128xf32>, vector<128x128xf32>, vector<16x128xf32> -> vector<16x128xf32>
    %7 = arith.addf %3, %6 : vector<16x128xf32>
    %c0_6 = arith.constant 0 : index
    %c0_7 = arith.constant 0 : index
    %8 = vector.load %arg7[%c0_6, %c0_7] : memref<16x128xf32, #tpu.memory_space<vmem>>, vector<16x128xf32>
    tpu.vector_store %arg7[%c0_6, %c0_7], %7 {strides = array<i32>} : memref<16x128xf32, #tpu.memory_space<vmem>>, vector<16x128xf32>,
    %c0_i32_8 = arith.constant 0 : i32
    %9 = arith.cmpi eq, %arg2, %c0_i32_8 : i32
    %10 = arith.extui %9 : i1 to i32
    %c0_i32_9 = arith.constant 0 : i32
    %11 = arith.cmpi ne, %10, %c0_i32_9 : i32
    scf.if %11 {
      %c0_10 = arith.constant 0 : index
      %c0_11 = arith.constant 0 : index
      %12 = vector.load %arg7[%c0_10, %c0_11] : memref<16x128xf32, #tpu.memory_space<vmem>>, vector<16x128xf32>
      %c0_12 = arith.constant 0 : index
      %c0_13 = arith.constant 0 : index
      %13 = vector.load %arg5[%c0_12, %c0_13] : memref<1x128xf32, #tpu.memory_space<vmem>>, vector<1x128xf32>
      %14 = vector.broadcast %13 : vector<1x128xf32> to vector<16x128xf32>
      %15 = arith.addf %12, %14 : vector<16x128xf32>
      %cst_14 = arith.constant 0.000000e+00 : f32
      %16 = vector.broadcast %cst_14 : f32 to vector<16x128xf32>
      %17 = arith.cmpf oge, %15, %16 : vector<16x128xf32>
      %cst_15 = arith.constant 0.00999999977 : f32
      %18 = vector.broadcast %cst_15 : f32 to vector<16x128xf32>
      %19 = arith.mulf %18, %15 : vector<16x128xf32>
      %20 = arith.select %17, %15, %19 : vector<16x128xi1>, vector<16x128xf32>
      %cst_16 = arith.constant 0.000000e+00 : f32
      %21 = vector.broadcast %cst_16 : f32 to vector<16x128xf32>
      %22 = arith.subf %21, %20 : vector<16x128xf32>
      %23 = math.exp %22 : vector<16x128xf32>
      %cst_17 = arith.constant 1.000000e+00 : f32
      %24 = vector.broadcast %cst_17 : f32 to vector<16x128xf32>
      %25 = arith.addf %24, %23 : vector<16x128xf32>
      %26 = tpu.reciprocal %25 {approx = true} : vector<16x128xf32> -> vector<16x128xf32>
      %c0_18 = arith.constant 0 : index
      %c0_19 = arith.constant 0 : index
      %27 = vector.load %arg6[%c0_18, %c0_19] : memref<16x128xf32, #tpu.memory_space<vmem>>, vector<16x128xf32>
      tpu.vector_store %arg6[%c0_18, %c0_19], %26 {strides = array<i32>} : memref<16x128xf32, #tpu.memory_space<vmem>>, vector<16x128xf32>,
    } else {
    }
    return
  }
  func.func @transform_0(%arg0: i32, %arg1: i32, %arg2: i32) -> (i32, i32) {
    %c0_i32 = arith.constant 0 : i32
    return %arg0, %arg2 : i32, i32
  }
  func.func @transform_1(%arg0: i32, %arg1: i32, %arg2: i32) -> (i32, i32) {
    %c0_i32 = arith.constant 0 : i32
    return %arg1, %arg2 : i32, i32
  }
  func.func @transform_2(%arg0: i32, %arg1: i32, %arg2: i32) -> (i32, i32) {
    %c0_i32 = arith.constant 0 : i32
    %c0_i32_0 = arith.constant 0 : i32
    return %c0_i32, %arg1 : i32, i32
  }
  func.func @transform_3(%arg0: i32, %arg1: i32, %arg2: i32) -> (i32, i32) {
    %c0_i32 = arith.constant 0 : i32
    return %arg0, %arg1 : i32, i32
  }
}

</mosaic_0001>

<llo_original>
// kernel: sequential_forward.1
$region0: #{sequential_forward.1}
  #allocation0 [shape = 'u32[]', space=smem, size = 0x4, offset = 0x4, fixed_abs, tag = 'smem constant byte address 0x4 - core index']
  #allocation1 [shape = 'u32[144,128]{1,0:T(1,128)}', space=vmem, size = 0x12000, scoped, tag = 'internal scratch']
  #allocation2 [shape = 'f32[16,128]{1,0:T(8,128)}', space=vmem, size = 0x2000, scoped, tag = 'scratch operand']
  %s0 = inlined_call_operand.vmem [shape: f32[16,128], index: 0, kind: input, shape index: {}]
  %s1 = inlined_call_operand.vmem [shape: f32[128,128], index: 1, kind: input, shape index: {}]
  %s2 = inlined_call_operand.vmem [shape: f32[1,128], index: 2, kind: input, shape index: {}]
  %s3 = inlined_call_operand.hbm [shape: f32[16,128], index: 3, kind: output, shape index: {}]
  %s4 = sld [smem:[#allocation0]]
  $region30: #{sequential_forward.1} parent=0
    _
  %s6 = ssub.s32 1, %s4
  %s7 = scalar_select 0, %s6, %s4
  $region1: #{sequential_forward.1} parent=0
    #allocation3 [shape = 'u8[8192]{0}', space=vmem, size = 0x2000, scoped, tag = 'output window, operand 0, single buffered']
    #allocation4 [shape = 's32[1]{0}', space=sflag, size = 0x4, scoped, tag = 'scoped memory for sequential_forward.1']
    %8 = vsyncpa [#allocation4], 0
    // Predicated region
    $region2: #{sequential_forward.1} parent=1 // pred_check
      _
    $region3: #{sequential_forward.1} parent=1 // pred_check_branch
      %10 = sbr.rel (0) target = $region5
    $region4: #{sequential_forward.1} parent=1 // pred_region
      _
    $region5: #{sequential_forward.1} parent=1 // pred_fallthru
      _
    // Predicated region
    $region6: #{sequential_forward.1} parent=1 // pred_check
      _
    $region7: #{sequential_forward.1} parent=1 // pred_check_branch
      %12 = sbr.rel (0) target = $region9
    $region8: #{sequential_forward.1} parent=1 // pred_region
      _
    $region9: #{sequential_forward.1} parent=1 // pred_fallthru
      _
    // Predicated region
    $region10: #{sequential_forward.1} parent=1 // pred_check
      _
    $region11: #{sequential_forward.1} parent=1 // pred_check_branch
      %14 = sbr.rel (0) target = $region13
    $region12: #{sequential_forward.1} parent=1 // pred_region
      _
    $region13: #{sequential_forward.1} parent=1 // pred_fallthru
      _
    %p15 = scmp.eq.s32.totalorder 0, 0
    // Predicated region
    $region14: #{sequential_forward.1} parent=1 // pred_check
      %p16 = pneg %p15
    $region15: #{sequential_forward.1} parent=1 // pred_check_branch
      %18 = sbr.rel (%p16) target = $region17
    $region16: #{sequential_forward.1} parent=1 // pred_region
      %19 = vst [vmem:[#allocation2] sm:$0xff] 0.0
      %20 = vst [vmem:[#allocation2 + $0x8] sm:$0xff] 0.0
    $region17: #{sequential_forward.1} parent=1 // pred_fallthru
      _
    %v21 = vld [vmem:[#allocation2] sm:$0xff]
    %v22 = vld [vmem:[#allocation2 + $0x8] sm:$0xff]
    %v23 = vld [vmem:[%s0] sm:$0xff]
    %v24 = vld [vmem:[%s0 + $0x8] sm:$0xff]
    %v25 = vld [vmem:[%s1] sm:$0xff]
    %v26 = vld [vmem:[%s1 + $0x8] sm:$0xff]
    %v27 = vld [vmem:[%s1 + $0x10] sm:$0xff]
    %v28 = vld [vmem:[%s1 + $0x18] sm:$0xff]
    %v29 = vld [vmem:[%s1 + $0x20] sm:$0xff]
    %v30 = vld [vmem:[%s1 + $0x28] sm:$0xff]
    %v31 = vld [vmem:[%s1 + $0x30] sm:$0xff]
    %v32 = vld [vmem:[%s1 + $0x38] sm:$0xff]
    %v33 = vld [vmem:[%s1 + $0x40] sm:$0xff]
    %v34 = vld [vmem:[%s1 + $0x48] sm:$0xff]
    %v35 = vld [vmem:[%s1 + $0x50] sm:$0xff]
    %v36 = vld [vmem:[%s1 + $0x58] sm:$0xff]
    %v37 = vld [vmem:[%s1 + $0x60] sm:$0xff]
    %v38 = vld [vmem:[%s1 + $0x68] sm:$0xff]
    %v39 = vld [vmem:[%s1 + $0x70] sm:$0xff]
    %v40 = vld [vmem:[%s1 + $0x78] sm:$0xff]
    %41 = vmatprep.subr.mxu0 0.0
    %42 = vmatpush1.xpose.msra.mxu0 %v25
    %43 = vmatprep.subr.mxu0 0.0
    %44 = vmatpush1.xpose.msra.mxu0 %v26
    %45 = vmatprep.subr.mxu0 0.0
    %46 = vmatpush1.xpose.msra.mxu0 %v27
    %47 = vmatprep.subr.mxu0 0.0
    %48 = vmatpush1.xpose.msra.mxu0 %v28
    %49 = vmatprep.subr.mxu0 0.0
    %50 = vmatpush1.xpose.msra.mxu0 %v29
    %51 = vmatprep.subr.mxu0 0.0
    %52 = vmatpush1.xpose.msra.mxu0 %v30
    %53 = vmatprep.subr.mxu0 0.0
    %54 = vmatpush1.xpose.msra.mxu0 %v31
    %55 = vmatprep.subr.mxu0 0.0
    %56 = vmatpush1.xpose.msra.mxu0 %v32
    %57 = vmatprep.subr.mxu0 0.0
    %58 = vmatpush1.xpose.msra.mxu0 %v33
    %59 = vmatprep.subr.mxu0 0.0
    %60 = vmatpush1.xpose.msra.mxu0 %v34
    %61 = vmatprep.subr.mxu0 0.0
    %62 = vmatpush1.xpose.msra.mxu0 %v35
    %63 = vmatprep.subr.mxu0 0.0
    %64 = vmatpush1.xpose.msra.mxu0 %v36
    %65 = vmatprep.subr.mxu0 0.0
    %66 = vmatpush1.xpose.msra.mxu0 %v37
    %67 = vmatprep.subr.mxu0 0.0
    %68 = vmatpush1.xpose.msra.mxu0 %v38
    %69 = vmatprep.subr.mxu0 0.0
    %70 = vmatpush1.xpose.msra.mxu0 %v39
    %71 = vmatprep.subr.mxu0 0.0
    %72 = vmatpush1.xpose.msra.mxu0 %v40
    %73 = vmatprep.subr.mxu0 0.0
    %74 = vmatpush1.xpose.msra.mxu0 0.0
    %75 = vmatprep.subr.mxu0 0.0
    %76 = vmatpush1.xpose.msra.mxu0 0.0
    %77 = vmatprep.subr.mxu0 0.0
    %78 = vmatpush1.xpose.msra.mxu0 0.0
    %79 = vmatprep.subr.mxu0 0.0
    %80 = vmatpush1.xpose.msra.mxu0 0.0
    %81 = vmatprep.subr.mxu0 0.0
    %82 = vmatpush1.xpose.msra.mxu0 0.0
    %83 = vmatprep.subr.mxu0 0.0
    %84 = vmatpush1.xpose.msra.mxu0 0.0
    %85 = vmatprep.subr.mxu0 0.0
    %86 = vmatpush1.xpose.msra.mxu0 0.0
    %87 = vmatprep.subr.mxu0 0.0
    %88 = vmatpush1.xpose.msra.mxu0 0.0
    %89 = vmatprep.subr.mxu0 0.0
    %90 = vmatpush1.xpose.msra.mxu0 0.0
    %91 = vmatprep.subr.mxu0 0.0
    %92 = vmatpush1.xpose.msra.mxu0 0.0
    %93 = vmatprep.subr.mxu0 0.0
    %94 = vmatpush1.xpose.msra.mxu0 0.0
    %95 = vmatprep.subr.mxu0 0.0
    %96 = vmatpush1.xpose.msra.mxu0 0.0
    %97 = vmatprep.subr.mxu0 0.0
    %98 = vmatpush1.xpose.msra.mxu0 0.0
    %99 = vmatprep.subr.mxu0 0.0
    %100 = vmatpush1.xpose.msra.mxu0 0.0
    %101 = vmatprep.subr.mxu0 0.0
    %102 = vmatpush1.xpose.msra.mxu0 0.0
    %103 = vmatprep.subr.mxu0 0.0
    %104 = vmatpush1.xpose.msra.mxu0 0.0
    %105 = vmatprep.mubr.f32.mxu0 0.0
    %106 = vmatmul.mubr.f32.gmra.mrb[0].mxu0 %v23
    %v107 = vpop.f32.mrb[0].mxu0
    %v108 = vadd.f32 0.0, %v107
    %v109 = vpop.f32.mrb[0].mxu0
    %110 = vmatprep.mubr.f32.mxu0 0.0
    %111 = vmatmul.mubr.f32.gmra.mrb[0].mxu0 %v24
    %v112 = vpop.f32.mrb[0].mxu0
    %v113 = vadd.f32 0.0, %v112
    %v114 = vpop.f32.mrb[0].mxu0
    %115 = vdwg.mxu0
    %v116 = vadd.f32 %v21, %v108
    %v117 = vadd.f32 %v22, %v113
    %118 = vst [vmem:[#allocation2] sm:$0xff] %v116
    %119 = vst [vmem:[#allocation2 + $0x8] sm:$0xff] %v117
    // Predicated region
    $region18: #{sequential_forward.1} parent=1 // pred_check
      %p120 = pneg %p15
    $region19: #{sequential_forward.1} parent=1 // pred_check_branch
      %122 = sbr.rel (%p120) target = $region21
    $region20: #{sequential_forward.1} parent=1 // pred_region
      %v123 = vld [vmem:[#allocation2] sm:$0xff]
      %v124 = vld [vmem:[#allocation2 + $0x8] sm:$0xff]
      %v125 = vld [vmem:[%s2] sm:$0x1]
      %v127 = vlaneseq
      %v128 = vshrl.u32 %v127, 7
      %v129 = vsub.s32 0, %v128
      %v130 = vrot.slane %v125, %v129
      %v132 = vadd.f32 %v123, %v130
      %v133 = vadd.f32 %v124, %v130
      %vm134 = vcmp.ge.f32.partialorder %v132, 0.0
      %vm135 = vcmp.ge.f32.partialorder %v133, 0.0
      %v136 = vmul.f32 %v132, 0.01
      %v137 = vmul.f32 %v133, 0.01
      %v138 = vsel %vm134, %v132, %v136
      %v139 = vsel %vm135, %v133, %v137
      %v140 = vsub.f32 0.0, %v138
      %v141 = vsub.f32 0.0, %v139
      %v142 = vmul.f32 %v140, 1.442695
      %v143 = vpow.pop %v142
      %v144 = vmul.f32 %v141, 1.442695
      %v145 = vpow.pop %v144
      %v146 = vadd.f32 %v143, 1.0
      %v147 = vadd.f32 %v145, 1.0
      %v148 = vrcp.pop %v146
      %v149 = vrcp.pop %v147
      %150 = vst [vmem:[#allocation3] sm:$0xff] %v148
      %151 = vst [vmem:[#allocation3 + $0x8] sm:$0xff] %v149
    $region21: #{sequential_forward.1} parent=1 // pred_fallthru
      _
    // Predicated region
    $region22: #{sequential_forward.1} parent=1 // pred_check
      _
    $region23: #{sequential_forward.1} parent=1 // pred_check_branch
      %153 = sbr.rel (0) target = $region25
    $region24: #{sequential_forward.1} parent=1 // pred_region
      %s155 = ssub.s32 256, 256
      %156 = vsyncadd [#allocation4], %s155
      %s157 = sshll.u32 [#allocation3], 4
      %s158 = int_to_ptr.vmem [resolvable:$true] %s157
      %163 = dma.vmem_to_hbm [thread:$0]  %s158, 256, %s3, [#allocation4], 128, 128, 8
    $region25: #{sequential_forward.1} parent=1 // pred_fallthru
      _
    // Predicated region
    $region26: #{sequential_forward.1} parent=1 // pred_check
      _
    $region27: #{sequential_forward.1} parent=1 // pred_check_branch
      %165 = sbr.rel (0) target = $region29
    $region28: #{sequential_forward.1} parent=1 // pred_region
      %166 = dma.done [#allocation4], 256
    $region29: #{sequential_forward.1} parent=1 // pred_fallthru
      _
    %167 = vsyncpa [#allocation4], 1

</llo_original>
